<compile_context>
chip_gen: v6e
topology: v6e:2x2x1
jax: 0.10.0
libtpu: 0.0.40
codegen_flags: <defaults>
</compile_context>

<pallas_src>
import jax
import jax.numpy as jnp
from jax.experimental import pallas as pl
from jax.experimental.pallas import tpu as pltpu


def cfg_denoiser_kernel(sigma_ref, cscale_ref,            # scalar-prefetch (SMEM)
                        x_ref, uncond_t_ref, cond_t_ref,  # VMEM inputs
                        w1t_ref, wct_ref,                 # VMEM weights
                        out_ref):                         # VMEM output
    b = pl.program_id(0)
    sig = sigma_ref[b]            # per-sample sigma (scalar)
    cs = cscale_ref[0]            # cond_scale (scalar, shared across batch)

    x = x_ref[0]                  # (C, HW_TILE)  -- HW on the lane axis (lane-dense)

    # Fold sigma into the tiny (C, C) weight instead of scaling the full activation.
    w_sig = w1t_ref[...].astype(jnp.float32) * sig                      # (C, C)

    # Shared inner-model body: identical for both halves of the doubled batch
    # (same x, same sigma), so compute it once.
    h = jnp.dot(w_sig, x, preferred_element_type=jnp.float32)           # (C, HW_TILE)

    # CFG combine in conditioning space (everything downstream is linear, so this is
    # algebraically identical to combining the two inner-model outputs).
    u_t = uncond_t_ref[0].astype(jnp.float32)                           # (hidden, seq)
    c_t = cond_t_ref[0].astype(jnp.float32)                             # (hidden, seq)
    mix_t = u_t + (c_t - u_t) * cs                                      # (hidden, seq)

    proj = jnp.dot(wct_ref[...].astype(jnp.float32), mix_t,
                   preferred_element_type=jnp.float32)                  # (C, seq)
    bias = jnp.mean(proj, axis=-1, keepdims=True)                       # (C, 1)

    # Single broadcast add along lanes; no u_out / c_out temporaries.
    out_ref[0] = (h + bias).astype(out_ref.dtype)


def _pick_hw_tile(hw, cap=2048):
    """Largest lane tile <= cap that is a multiple of 128 and evenly divides HW.
    Falls back to the full HW extent (block == full dim is always legal)."""
    if hw <= cap:
        return hw
    t = (cap // 128) * 128
    while t >= 128:
        if hw % t == 0:
            return t
        t -= 128
    return hw


def _vmem_limit_bytes(c, hw_tile, hidden, seq, x_dtype, cond_dtype, w_dtype):
    """Budget: double-buffered x/out tiles + cond tiles + weights, with headroom.
    Clamped so it is safe on v5e (16 MiB scoped default) and v7x (64 MiB physical)."""
    x_b = c * hw_tile * jnp.dtype(x_dtype).itemsize
    cond_b = hidden * seq * jnp.dtype(cond_dtype).itemsize
    w_b = (c * c + c * hidden) * jnp.dtype(w_dtype).itemsize
    est = 2 * (2 * x_b + 2 * cond_b + w_b)
    return int(min(32 * 1024 * 1024, max(16 * 1024 * 1024, 4 * est)))


def cfg_denoiser(x_nchw, sigma, uncond, cond, cond_scale, w1, wc):
    """x_nchw: (N, C, H, W); sigma: (N,); uncond/cond: (N, seq, hidden);
    cond_scale: scalar; w1: (C_in, C_out); wc: (hidden, C)."""
    N, C, H, W = x_nchw.shape
    HW = H * W
    seq, hidden = uncond.shape[1], uncond.shape[2]

    # NCHW is already channel-major over HW: pure reshape, NO transpose of x.
    x = x_nchw.reshape(N, C, HW)

    # Tiny host-side reorientations (weights + conditioning only; x untouched).
    w1t = jnp.transpose(w1)                   # (C_out, C_in)
    wct = jnp.transpose(wc)                   # (C, hidden)
    uncond_t = jnp.swapaxes(uncond, 1, 2)     # (N, hidden, seq)
    cond_t = jnp.swapaxes(cond, 1, 2)         # (N, hidden, seq)

    sigma = sigma.astype(jnp.float32)
    cscale = jnp.asarray([cond_scale], dtype=jnp.float32)

    hw_tile = _pick_hw_tile(HW)
    n_hw = HW // hw_tile

    grid_spec = pltpu.PrefetchScalarGridSpec(
        num_scalar_prefetch=2,
        grid=(N, n_hw),                       # both axes independent -> "parallel"
        in_specs=[
            pl.BlockSpec((1, C, hw_tile), lambda b, t, sig, cs: (b, 0, t)),        # x
            pl.BlockSpec((1, hidden, seq), lambda b, t, sig, cs: (b, 0, 0)),       # uncond^T
            pl.BlockSpec((1, hidden, seq), lambda b, t, sig, cs: (b, 0, 0)),       # cond^T
            pl.BlockSpec((C, C), lambda b, t, sig, cs: (0, 0)),                    # w1^T
            pl.BlockSpec((C, hidden), lambda b, t, sig, cs: (0, 0)),               # wc^T
        ],
        out_specs=pl.BlockSpec((1, C, hw_tile), lambda b, t, sig, cs: (b, 0, t)),
    )

    out = pl.pallas_call(
        cfg_denoiser_kernel,
        out_shape=jax.ShapeDtypeStruct((N, C, HW), x.dtype),
        grid_spec=grid_spec,
        compiler_params=pltpu.CompilerParams(
            dimension_semantics=("parallel", "parallel"),
            vmem_limit_bytes=_vmem_limit_bytes(
                C, hw_tile, hidden, seq, x.dtype, uncond.dtype, w1.dtype)),
    )(sigma, cscale, x, uncond_t, cond_t, w1t, wct)

    # (N, C, HW) -> NCHW: pure reshape, no data movement.
    return out.reshape(N, C, H, W)


def cfg_denoiser_reference(x_nchw, sigma, uncond, cond, cond_scale, w1, wc):
    """Pure-JAX reference mirroring the PyTorch forward exactly (doubled batch)."""
    N, C, H, W = x_nchw.shape
    x = jnp.transpose(x_nchw, (0, 2, 3, 1)).reshape(N, H * W, C)
    x_in = jnp.concatenate([x, x], axis=0)
    sigma_in = jnp.concatenate([sigma, sigma], axis=0)
    cond_in = jnp.concatenate([uncond, cond], axis=0)
    bias = jnp.mean(cond_in, axis=1) @ wc                            # (2N, C)
    h = (jnp.einsum('bsc,cd->bsd', x_in, w1)
         * sigma_in[:, None, None] + bias[:, None, :])               # inner model
    u, c = jnp.split(h, 2, axis=0)
    out = u + (c - u) * cond_scale
    return jnp.transpose(out.reshape(N, H, W, C), (0, 3, 1, 2))


if __name__ == "__main__":
    key = jax.random.PRNGKey(0)
    kx, ks, ku, kc, kw1, kwc = jax.random.split(key, 6)

    N, C, H, W = 2, 4, 16, 16
    seq, hidden = 8, 32
    cond_scale = 7.5

    x = jax.random.normal(kx, (N, C, H, W), dtype=jnp.float32)
    sigma = jax.random.uniform(ks, (N,), dtype=jnp.float32) + 0.5
    uncond = jax.random.normal(ku, (N, seq, hidden), dtype=jnp.float32)
    cond = jax.random.normal(kc, (N, seq, hidden), dtype=jnp.float32)
    # Deterministic synthetic inner-model weights.
    # TODO(synk): the PyTorch module wraps an arbitrary `inner_model`; this linear
    # denoiser stands in for it so the full doubled-batch forward + CFG can be fused.
    w1 = jax.random.normal(kw1, (C, C), dtype=jnp.float32) * 0.1
    wc = jax.random.normal(kwc, (hidden, C), dtype=jnp.float32) * 0.1

    out = cfg_denoiser(x, sigma, uncond, cond, cond_scale, w1, wc)
    out = jax.block_until_ready(out)

    ref = cfg_denoiser_reference(x, sigma, uncond, cond, cond_scale, w1, wc)
    assert out.shape == (N, C, H, W)
    assert jnp.allclose(out, ref, atol=1e-4, rtol=1e-4), "mismatch vs reference"

    print("KERNEL_OK")
</pallas_src>

<mosaic_0001>
module attributes {stable_mosaic.version = 11 : i64} {
  func.func @cfg_denoiser_kernel(%arg0: i32, %arg1: i32, %arg2: memref<2xf32, #tpu.memory_space<smem>>, %arg3: memref<1xf32, #tpu.memory_space<smem>>, %arg4: memref<1x4x256xf32, #tpu.memory_space<vmem>>, %arg5: memref<1x32x8xf32, #tpu.memory_space<vmem>>, %arg6: memref<1x32x8xf32, #tpu.memory_space<vmem>>, %arg7: memref<4x4xf32, #tpu.memory_space<vmem>>, %arg8: memref<4x32xf32, #tpu.memory_space<vmem>>, %arg9: memref<1x4x256xf32, #tpu.memory_space<vmem>>) attributes {dimension_semantics = [#tpu.dimension_semantics<parallel>, #tpu.dimension_semantics<parallel>], iteration_bounds = array<i64: 2, 1>, scalar_prefetch = 2 : i64, scratch_operands = 0 : i64, tpu.core_type = #tpu.core_type<tc>, window_params = [{transform_indices = @transform_0, window_bounds = array<i64: 1, 4, 256>}, {transform_indices = @transform_1, window_bounds = array<i64: 1, 32, 8>}, {transform_indices = @transform_2, window_bounds = array<i64: 1, 32, 8>}, {pipeline_mode = #tpu.pipeline_mode<synchronous>, transform_indices = @transform_3, window_bounds = array<i64: 4, 4>}, {pipeline_mode = #tpu.pipeline_mode<synchronous>, transform_indices = @transform_4, window_bounds = array<i64: 4, 32>}, {transform_indices = @transform_5, window_bounds = array<i64: 1, 4, 256>}]} {
    %0 = arith.index_cast %arg0 : i32 to index
    %1 = memref.load %arg2[%0] : memref<2xf32, #tpu.memory_space<smem>>
    %c0 = arith.constant 0 : index
    %2 = memref.load %arg3[%c0] : memref<1xf32, #tpu.memory_space<smem>>
    %c0_0 = arith.constant 0 : index
    %c0_1 = arith.constant 0 : index
    %c0_2 = arith.constant 0 : index
    %3 = vector.load %arg4[%c0_0, %c0_1, %c0_2] : memref<1x4x256xf32, #tpu.memory_space<vmem>>, vector<1x4x256xf32>
    %4 = vector.shape_cast %3 : vector<1x4x256xf32> to vector<4x256xf32>
    %c0_3 = arith.constant 0 : index
    %c0_4 = arith.constant 0 : index
    %5 = vector.load %arg7[%c0_3, %c0_4] : memref<4x4xf32, #tpu.memory_space<vmem>>, vector<4x4xf32>
    %6 = vector.broadcast %1 : f32 to vector<4x4xf32>
    %7 = arith.mulf %5, %6 : vector<4x4xf32>
    %cst = arith.constant dense<0.000000e+00> : vector<4x256xf32>
    %8 = tpu.matmul %7, %4, %cst {dimension_numbers = #tpu.dot_dimension_numbers<[1], [0], [0], [1], [0, 0, 1, 1], [], []>} : vector<4x4xf32>, vector<4x256xf32>, vector<4x256xf32> -> vector<4x256xf32>
    %c0_5 = arith.constant 0 : index
    %c0_6 = arith.constant 0 : index
    %c0_7 = arith.constant 0 : index
    %9 = vector.load %arg5[%c0_5, %c0_6, %c0_7] : memref<1x32x8xf32, #tpu.memory_space<vmem>>, vector<1x32x8xf32>
    %10 = vector.shape_cast %9 : vector<1x32x8xf32> to vector<32x8xf32>
    %c0_8 = arith.constant 0 : index
    %c0_9 = arith.constant 0 : index
    %c0_10 = arith.constant 0 : index
    %11 = vector.load %arg6[%c0_8, %c0_9, %c0_10] : memref<1x32x8xf32, #tpu.memory_space<vmem>>, vector<1x32x8xf32>
    %12 = vector.shape_cast %11 : vector<1x32x8xf32> to vector<32x8xf32>
    %13 = arith.subf %12, %10 : vector<32x8xf32>
    %14 = vector.broadcast %2 : f32 to vector<32x8xf32>
    %15 = arith.mulf %13, %14 : vector<32x8xf32>
    %16 = arith.addf %10, %15 : vector<32x8xf32>
    %c0_11 = arith.constant 0 : index
    %c0_12 = arith.constant 0 : index
    %17 = vector.load %arg8[%c0_11, %c0_12] : memref<4x32xf32, #tpu.memory_space<vmem>>, vector<4x32xf32>
    %cst_13 = arith.constant dense<0.000000e+00> : vector<4x8xf32>
    %18 = tpu.matmul %17, %16, %cst_13 {dimension_numbers = #tpu.dot_dimension_numbers<[1], [0], [0], [1], [0, 0, 1, 1], [], []>} : vector<4x32xf32>, vector<32x8xf32>, vector<4x8xf32> -> vector<4x8xf32>
    %cst_14 = arith.constant dense<0.000000e+00> : vector<4xf32>
    %19 = vector.multi_reduction <add>, %18, %cst_14 [1] : vector<4x8xf32> to vector<4xf32>
    %20 = vector.shape_cast %19 : vector<4xf32> to vector<4x1xf32>
    %cst_15 = arith.constant 8.000000e+00 : f32
    %21 = vector.broadcast %cst_15 : f32 to vector<4x1xf32>
    %22 = arith.divf %20, %21 : vector<4x1xf32>
    %23 = vector.broadcast %22 : vector<4x1xf32> to vector<4x256xf32>
    %24 = arith.addf %8, %23 : vector<4x256xf32>
    %c0_16 = arith.constant 0 : index
    %c0_17 = arith.constant 0 : index
    %c0_18 = arith.constant 0 : index
    %25 = vector.load %arg9[%c0_16, %c0_17, %c0_18] : memref<1x4x256xf32, #tpu.memory_space<vmem>>, vector<1x4x256xf32>
    %26 = vector.shape_cast %25 : vector<1x4x256xf32> to vector<4x256xf32>
    %27 = vector.shape_cast %24 : vector<4x256xf32> to vector<1x4x256xf32>
    tpu.vector_store %arg9[%c0_16, %c0_17, %c0_18], %27 {strides = array<i32>} : memref<1x4x256xf32, #tpu.memory_space<vmem>>, vector<1x4x256xf32>,
    return
  }
  func.func @transform_0(%arg0: i32, %arg1: i32, %arg2: memref<2xf32, #tpu.memory_space<smem>>, %arg3: memref<1xf32, #tpu.memory_space<smem>>) -> (i32, i32, i32) {
    %c0_i32 = arith.constant 0 : i32
    %c0_i32_0 = arith.constant 0 : i32
    return %arg0, %c0_i32, %arg1 : i32, i32, i32
  }
  func.func @transform_1(%arg0: i32, %arg1: i32, %arg2: memref<2xf32, #tpu.memory_space<smem>>, %arg3: memref<1xf32, #tpu.memory_space<smem>>) -> (i32, i32, i32) {
    %c0_i32 = arith.constant 0 : i32
    %c0_i32_0 = arith.constant 0 : i32
    %c0_i32_1 = arith.constant 0 : i32
    return %arg0, %c0_i32, %c0_i32_0 : i32, i32, i32
  }
  func.func @transform_2(%arg0: i32, %arg1: i32, %arg2: memref<2xf32, #tpu.memory_space<smem>>, %arg3: memref<1xf32, #tpu.memory_space<smem>>) -> (i32, i32, i32) {
    %c0_i32 = arith.constant 0 : i32
    %c0_i32_0 = arith.constant 0 : i32
    %c0_i32_1 = arith.constant 0 : i32
    return %arg0, %c0_i32, %c0_i32_0 : i32, i32, i32
  }
  func.func @transform_3(%arg0: i32, %arg1: i32, %arg2: memref<2xf32, #tpu.memory_space<smem>>, %arg3: memref<1xf32, #tpu.memory_space<smem>>) -> (i32, i32) {
    %c0_i32 = arith.constant 0 : i32
    %c0_i32_0 = arith.constant 0 : i32
    %c0_i32_1 = arith.constant 0 : i32
    return %c0_i32, %c0_i32_0 : i32, i32
  }
  func.func @transform_4(%arg0: i32, %arg1: i32, %arg2: memref<2xf32, #tpu.memory_space<smem>>, %arg3: memref<1xf32, #tpu.memory_space<smem>>) -> (i32, i32) {
    %c0_i32 = arith.constant 0 : i32
    %c0_i32_0 = arith.constant 0 : i32
    %c0_i32_1 = arith.constant 0 : i32
    return %c0_i32, %c0_i32_0 : i32, i32
  }
  func.func @transform_5(%arg0: i32, %arg1: i32, %arg2: memref<2xf32, #tpu.memory_space<smem>>, %arg3: memref<1xf32, #tpu.memory_space<smem>>) -> (i32, i32, i32) {
    %c0_i32 = arith.constant 0 : i32
    %c0_i32_0 = arith.constant 0 : i32
    return %arg0, %c0_i32, %arg1 : i32, i32, i32
  }
}

</mosaic_0001>

<llo_original>
// kernel: tpu_custom_call.1
$region0: #{tpu_custom_call.1}
  #allocation0 [shape = 'u32[]', space=smem, size = 0x4, offset = 0x4, fixed_abs, tag = 'smem constant byte address 0x4 - core index']
  #allocation1 [shape = 'u32[144,128]{1,0:T(1,128)}', space=vmem, size = 0x12000, scoped, tag = 'internal scratch']
  #allocation2 [shape = 's32[1]{0}', space=sflag, size = 0x4, scoped, tag = 'scoped memory for tpu_custom_call.1']
  #allocation3 [shape = 'u8[512]{0}', space=smem, size = 0x200, scoped, tag = 'prefetched SMEM operand 0']
  #allocation4 [shape = 'f32[1]{0:T(128)S(6)}', space=smem, size = 0x200, scoped, tag = 'prefetched SMEM operand 1']
  %s0 = inlined_call_operand.vmem [shape: f32[2], index: 0, kind: input, shape index: {}]
  %s1 = inlined_call_operand.<no memory space> [shape: f32[1], index: 1, kind: input, shape index: {}]
  %s2 = inlined_call_operand.vmem [shape: f32[2,4,256], index: 2, kind: input, shape index: {}]
  %s3 = inlined_call_operand.vmem [shape: f32[2,32,8], index: 3, kind: input, shape index: {}]
  %s4 = inlined_call_operand.vmem [shape: f32[2,32,8], index: 4, kind: input, shape index: {}]
  %s5 = inlined_call_operand.vmem [shape: f32[4,4], index: 5, kind: input, shape index: {}]
  %s6 = inlined_call_operand.vmem [shape: f32[4,32], index: 6, kind: input, shape index: {}]
  %s7 = inlined_call_operand.hbm [shape: f32[2,4,256], index: 7, kind: output, shape index: {}]
  %s8 = sld [smem:[#allocation0]]
  $region53: #{tpu_custom_call.1} parent=0
    _
  %s10 = ssub.s32 1, %s8
  %s11 = scalar_select 0, %s10, %s8
  %s12 = sshll.u32 %s0, 4
  %s13 = int_to_ptr.vmem [resolvable:$true] %s12
  %15 = dma.vmem_to_smem %s13, 16, [#allocation3], [#allocation2]
  %16 = sst [smem:[#allocation4]] %s1
  %17 = dma.done [#allocation2], 16
  %18 = sfence
  $region1: #{tpu_custom_call.1} parent=0
    #allocation5 [shape = 'u8[8192]{0}', space=vmem, size = 0x2000, scoped, tag = 'output window, operand 0']
    #allocation6 [shape = 's32[2]{0}', space=sflag, size = 0x8, scoped, tag = 'scoped memory for tpu_custom_call.1']
    %19 = vsyncpa [#allocation6], 0
    %s20 = scalar_lea.sflag [#allocation6], 1
    %21 = vsyncpa %s20, 0
    loop: start=0, step=1, limit=4
    $region2: #{tpu_custom_call.1} parent=1 // loop_pre_header
      _
    $region3: #{tpu_custom_call.1} parent=1 // loop_header
      %s23 = sphi 0, %s27
      %p24 = scmp.ge.s32.totalorder %s23, 4
      %s30 = sphi 0, %s42
      %s31 = sphi 0, %s38
      %s32 = sphi 0, %s30
      %s33 = sphi 0, %s31
      %s34 = sphi 0, %s32
      %s35 = sphi 0, %s33
      %s47 = sphi 0, %s49
      %s50 = sphi 0, %s47
      %s51 = sphi 0, %s50
      %s67 = sphi 0, %s51
      %s73 = sphi 0, %s75
      %s76 = sphi 0, %s73
      %s77 = sphi 0, %s76
      %s93 = sphi 0, %s77
      %s99 = sphi 0, %s101
      %s102 = sphi 0, %s99
      %s103 = sphi 0, %s102
      %s119 = sphi 0, %s103
      %s123 = sphi 0, %s123
      %s125 = sphi 0, %s123
      %s126 = sphi 0, %s125
      %s140 = sphi 0, %s126
      %s144 = sphi 0, %s144
      %s146 = sphi 0, %s144
      %s147 = sphi 0, %s146
      %s161 = sphi 0, %s147
      %s169 = sphi 0, %s171
      %s172 = sphi 0, %s169
      %s173 = sphi 0, %s172
      %s189 = sphi 0, %s173
    $region4: #{tpu_custom_call.1} parent=1 // loop_header_branch
      %26 = sbr.rel (%p24) target = $region8
    $region5: #{tpu_custom_call.1} parent=1 // loop_body
      %s28 = ssub.s32 %s23, 1
      %s29 = ssub.s32 %s23, 2
      %s36 = sadd.s32 1, %s31
      %p37 = scmp.ge.s32.totalorder %s36, 1
      %s38 = scalar_select %p37, 0, %s36
      %s39 = sadd.s32 1, %s30
      %s40 = scalar_select %p37, %s39, %s30
      %p41 = scmp.ge.s32.totalorder %s40, 2
      %s42 = scalar_select %p41, 0, %s40
      %s43 = ssub.s32 %s30, %s42
      %s44 = ssub.s32 %s31, %s38
      %s45 = sor.u32 %s43, %s44
      %p46 = scmp.eq.s32.totalorder %s45, 0
      %s48 = sadd.s32 %s47, 1
      %s49 = scalar_select %p46, %s47, %s48
      %p52 = pneg %p46
      %p53 = scmp.eq.s32.totalorder %s23, 1
      %p54 = por %p52, %p53
      %p55 = scmp.ne.s32.totalorder %s47, %s50
      %p56 = scmp.eq.s32.totalorder %s23, 0
      %p57 = por %p55, %p56
      %p58 = scmp.ne.s32.totalorder %s47, %s50
      %p59 = scmp.eq.s32.totalorder %s28, 1
      %p60 = por %p58, %p59
      %p61 = scmp.ne.s32.totalorder %s50, %s51
      %p62 = scmp.eq.s32.totalorder %s28, 0
      %p63 = por %p61, %p62
      %p64 = scmp.ne.s32.totalorder %s50, %s51
      %p65 = scmp.eq.s32.totalorder %s29, 1
      %p66 = por %p64, %p65
      %p68 = scmp.ne.s32.totalorder %s51, %s67
      %p69 = scmp.eq.s32.totalorder %s29, 0
      %p70 = por %p68, %p69
      %s71 = ssub.s32 %s30, %s42
      %p72 = scmp.eq.s32.totalorder %s71, 0
      %s74 = sadd.s32 %s73, 1
      %s75 = scalar_select %p72, %s73, %s74
      %p78 = pneg %p72
      %p79 = scmp.eq.s32.totalorder %s23, 1
      %p80 = por %p78, %p79
      %p81 = scmp.ne.s32.totalorder %s73, %s76
      %p82 = scmp.eq.s32.totalorder %s23, 0
      %p83 = por %p81, %p82
      %p84 = scmp.ne.s32.totalorder %s73, %s76
      %p85 = scmp.eq.s32.totalorder %s28, 1
      %p86 = por %p84, %p85
      %p87 = scmp.ne.s32.totalorder %s76, %s77
      %p88 = scmp.eq.s32.totalorder %s28, 0
      %p89 = por %p87, %p88
      %p90 = scmp.ne.s32.totalorder %s76, %s77
      %p91 = scmp.eq.s32.totalorder %s29, 1
      %p92 = por %p90, %p91
      %p94 = scmp.ne.s32.totalorder %s77, %s93
      %p95 = scmp.eq.s32.totalorder %s29, 0
      %p96 = por %p94, %p95
      %s97 = ssub.s32 %s30, %s42
      %p98 = scmp.eq.s32.totalorder %s97, 0
      %s100 = sadd.s32 %s99, 1
      %s101 = scalar_select %p98, %s99, %s100
      %p104 = pneg %p98
      %p105 = scmp.eq.s32.totalorder %s23, 1
      %p106 = por %p104, %p105
      %p107 = scmp.ne.s32.totalorder %s99, %s102
      %p108 = scmp.eq.s32.totalorder %s23, 0
      %p109 = por %p107, %p108
      %p110 = scmp.ne.s32.totalorder %s99, %s102
      %p111 = scmp.eq.s32.totalorder %s28, 1
      %p112 = por %p110, %p111
      %p113 = scmp.ne.s32.totalorder %s102, %s103
      %p114 = scmp.eq.s32.totalorder %s28, 0
      %p115 = por %p113, %p114
      %p116 = scmp.ne.s32.totalorder %s102, %s103
      %p117 = scmp.eq.s32.totalorder %s29, 1
      %p118 = por %p116, %p117
      %p120 = scmp.ne.s32.totalorder %s103, %s119
      %p121 = scmp.eq.s32.totalorder %s29, 0
      %p122 = por %p120, %p121
      %s124 = sadd.s32 %s123, 1
      %p127 = scmp.eq.s32.totalorder %s23, 1
      %p128 = scmp.ne.s32.totalorder %s123, %s125
      %p129 = scmp.eq.s32.totalorder %s23, 0
      %p130 = por %p128, %p129
      %p131 = scmp.ne.s32.totalorder %s123, %s125
      %p132 = scmp.eq.s32.totalorder %s28, 1
      %p133 = por %p131, %p132
      %p134 = scmp.ne.s32.totalorder %s125, %s126
      %p135 = scmp.eq.s32.totalorder %s28, 0
      %p136 = por %p134, %p135
      %p137 = scmp.ne.s32.totalorder %s125, %s126
      %p138 = scmp.eq.s32.totalorder %s29, 1
      %p139 = por %p137, %p138
      %p141 = scmp.ne.s32.totalorder %s126, %s140
      %p142 = scmp.eq.s32.totalorder %s29, 0
      %p143 = por %p141, %p142
      %s145 = sadd.s32 %s144, 1
      %p148 = scmp.eq.s32.totalorder %s23, 1
      %p149 = scmp.ne.s32.totalorder %s144, %s146
      %p150 = scmp.eq.s32.totalorder %s23, 0
      %p151 = por %p149, %p150
      %p152 = scmp.ne.s32.totalorder %s144, %s146
      %p153 = scmp.eq.s32.totalorder %s28, 1
      %p154 = por %p152, %p153
      %p155 = scmp.ne.s32.totalorder %s146, %s147
      %p156 = scmp.eq.s32.totalorder %s28, 0
      %p157 = por %p155, %p156
      %p158 = scmp.ne.s32.totalorder %s146, %s147
      %p159 = scmp.eq.s32.totalorder %s29, 1
      %p160 = por %p158, %p159
      %p162 = scmp.ne.s32.totalorder %s147, %s161
      %p163 = scmp.eq.s32.totalorder %s29, 0
      %p164 = por %p162, %p163
      %s165 = ssub.s32 %s30, %s42
      %s166 = ssub.s32 %s31, %s38
      %s167 = sor.u32 %s165, %s166
      %p168 = scmp.eq.s32.totalorder %s167, 0
      %s170 = sadd.s32 %s169, 1
      %s171 = scalar_select %p168, %s169, %s170
      %p174 = pneg %p168
      %p175 = scmp.eq.s32.totalorder %s23, 1
      %p176 = por %p174, %p175
      %p177 = scmp.ne.s32.totalorder %s169, %s172
      %p178 = scmp.eq.s32.totalorder %s23, 0
      %p179 = por %p177, %p178
      %p180 = scmp.ne.s32.totalorder %s169, %s172
      %p181 = scmp.eq.s32.totalorder %s28, 1
      %p182 = por %p180, %p181
      %p183 = scmp.ne.s32.totalorder %s172, %s173
      %p184 = scmp.eq.s32.totalorder %s28, 0
      %p185 = por %p183, %p184
      %p186 = scmp.ne.s32.totalorder %s172, %s173
      %p187 = scmp.eq.s32.totalorder %s29, 1
      %p188 = por %p186, %p187
      %p190 = scmp.ne.s32.totalorder %s173, %s189
      %p191 = scmp.eq.s32.totalorder %s29, 0
      %p192 = por %p190, %p191
      %p193 = scmp.le.s32.totalorder 1, %s23
      %p194 = scmp.lt.s32.totalorder %s23, 3
      %p195 = pnand %p193, %p194
      %p196 = pneg %p195
      // Predicated region
      $region9: #{tpu_custom_call.1} parent=5 // pred_check
        _
      $region10: #{tpu_custom_call.1} parent=5 // pred_check_branch
        %198 = sbr.rel (%p195) target = $region12
      $region11: #{tpu_custom_call.1} parent=5 // pred_region
        %s199 = ssub.s32 %s23, 1
        // Predicated region
        $region13: #{tpu_custom_call.1} parent=11 // pred_check
          %p200 = pneg %p136
        $region14: #{tpu_custom_call.1} parent=11 // pred_check_branch
          %202 = sbr.rel (%p200) target = $region16
        $region15: #{tpu_custom_call.1} parent=11 // pred_region
          _
        $region16: #{tpu_custom_call.1} parent=11 // pred_fallthru
          _
        // Predicated region
        $region17: #{tpu_custom_call.1} parent=11 // pred_check
          %p203 = pneg %p157
        $region18: #{tpu_custom_call.1} parent=11 // pred_check_branch
          %205 = sbr.rel (%p203) target = $region20
        $region19: #{tpu_custom_call.1} parent=11 // pred_region
          _
        $region20: #{tpu_custom_call.1} parent=11 // pred_fallthru
          _
      $region12: #{tpu_custom_call.1} parent=5 // pred_fallthru
        _
      %p206 = scmp.lt.s32.totalorder %s23, 2
      // Predicated region
      $region21: #{tpu_custom_call.1} parent=5 // pred_check
        %p207 = pneg %p206
      $region22: #{tpu_custom_call.1} parent=5 // pred_check_branch
        %209 = sbr.rel (%p207) target = $region24
      $region23: #{tpu_custom_call.1} parent=5 // pred_region
        // Predicated region
        $region25: #{tpu_custom_call.1} parent=23 // pred_check
          %p210 = pneg %p57
        $region26: #{tpu_custom_call.1} parent=23 // pred_check_branch
          %212 = sbr.rel (%p210) target = $region28
        $region27: #{tpu_custom_call.1} parent=23 // pred_region
          %s213 = smul.u32 2, %s31
          %p214 = scmp.lt.s32.totalorder %s30, 1
          %s215 = scalar_select %p214, %s30, 1
          %p216 = scmp.lt.s32.totalorder %s213, 1
          %s217 = scalar_select %p216, %s213, 1
          %s218 = smul.addr %s215, 2
          %s219 = sadd.s32 %s217, %s218
          %s220 = smul.addr %s219, 4
          %s221 = scalar_lea.vmem %s2, %s220
          %s222 = smul.u32 2, %s31
        $region28: #{tpu_custom_call.1} parent=23 // pred_fallthru
          _
        // Predicated region
        $region29: #{tpu_custom_call.1} parent=23 // pred_check
          %p223 = pneg %p83
        $region30: #{tpu_custom_call.1} parent=23 // pred_check_branch
          %225 = sbr.rel (%p223) target = $region32
        $region31: #{tpu_custom_call.1} parent=23 // pred_region
          %p226 = scmp.lt.s32.totalorder %s30, 1
          %s227 = scalar_select %p226, %s30, 1
          %s228 = smul.addr %s227, 4
          %s229 = smul.addr %s228, 8
          %s230 = scalar_lea.vmem %s3, %s229
        $region32: #{tpu_custom_call.1} parent=23 // pred_fallthru
          _
        // Predicated region
        $region33: #{tpu_custom_call.1} parent=23 // pred_check
          %p231 = pneg %p109
        $region34: #{tpu_custom_call.1} parent=23 // pred_check_branch
          %233 = sbr.rel (%p231) target = $region36
        $region35: #{tpu_custom_call.1} parent=23 // pred_region
          %p234 = scmp.lt.s32.totalorder %s30, 1
          %s235 = scalar_select %p234, %s30, 1
          %s236 = smul.addr %s235, 4
          %s237 = smul.addr %s236, 8
          %s238 = scalar_lea.vmem %s4, %s237
        $region36: #{tpu_custom_call.1} parent=23 // pred_fallthru
          _
      $region24: #{tpu_custom_call.1} parent=5 // pred_fallthru
        _
      %p239 = scmp.le.s32.totalorder 1, %s23
      %p240 = scmp.lt.s32.totalorder %s23, 3
      %p241 = pnand %p239, %p240
      %p242 = pneg %p241
      // Predicated region
      $region37: #{tpu_custom_call.1} parent=5 // pred_check
        _
      $region38: #{tpu_custom_call.1} parent=5 // pred_check_branch
        %244 = sbr.rel (%p241) target = $region40
      $region39: #{tpu_custom_call.1} parent=5 // pred_region
        %s245 = ssub.s32 %s23, 1
        %s246 = smul.u32 2, %s33
        %p247 = scmp.lt.s32.totalorder %s32, 1
        %s248 = scalar_select %p247, %s32, 1
        %p249 = scmp.lt.s32.totalorder %s246, 1
        %s250 = scalar_select %p249, %s246, 1
        %s251 = smul.addr %s248, 2
        %s252 = sadd.s32 %s250, %s251
        %s253 = smul.addr %s252, 4
        %s254 = scalar_lea.vmem %s2, %s253
        %p255 = pneg %p63
        %p256 = pneg %p60
        %p257 = scmp.lt.s32.totalorder %s32, 1
        %s258 = scalar_select %p257, %s32, 1
        %s259 = smul.addr %s258, 4
        %s260 = smul.addr %s259, 8
        %s261 = scalar_lea.vmem %s3, %s260
        %p262 = pneg %p89
        %p263 = pneg %p86
        %p264 = scmp.lt.s32.totalorder %s32, 1
        %s265 = scalar_select %p264, %s32, 1
        %s266 = smul.addr %s265, 4
        %s267 = smul.addr %s266, 8
        %s268 = scalar_lea.vmem %s4, %s267
        %p269 = pneg %p115
        %p270 = pneg %p112
        %p271 = pneg %p136
        %p272 = pneg %p133
        %p273 = pneg %p157
        %p274 = pneg %p154
        %p275 = pneg %p185
        %p276 = pneg %p182
        %s277 = sand.u32 %s172, 1
        %s278 = scalar_lea.sflag [#allocation6], %s277
        %s279 = sand.u32 %s172, 1
        %s280 = smul.addr %s279, 8
        %s281 = scalar_lea.vmem [#allocation5], %s280
        %s282 = smul.u32 2, %s33
        %p283 = scmp.lt.s32.totalorder %s32, 1
        %s284 = scalar_select %p283, %s32, 1
        %p285 = scmp.lt.s32.totalorder %s282, 1
        %s286 = scalar_select %p285, %s282, 1
        %s287 = smul.addr %s284, 2
        %s288 = sadd.s32 %s286, %s287
        %s289 = smul.addr %s288, 4
        %s290 = scalar_lea.vmem %s2, %s289
        %s291 = smul.u32 2, %s33
        %p292 = scmp.lt.s32.totalorder %s32, 1
        %s293 = scalar_select %p292, %s32, 1
        %s294 = smul.addr %s293, 4
        %s295 = smul.addr %s294, 8
        %s296 = scalar_lea.vmem %s3, %s295
        %p297 = scmp.lt.s32.totalorder %s32, 1
        %s298 = scalar_select %p297, %s32, 1
        %s299 = smul.addr %s298, 4
        %s300 = smul.addr %s299, 8
        %s301 = scalar_lea.vmem %s4, %s300
        %s302 = smul.u32 2, %s33
        %s303 = sld [smem:[#allocation3 + %s32]]
        %s304 = sld [smem:[#allocation4]]
        %v305 = vld [vmem:[%s290] sm:$0xff]
        %v306 = vld [vmem:[%s5] sm:$0xf]
        %v307 = vstv %s303
        %v308 = vmul.f32 %v306, %v307
        %v309 = vld [vmem:[%s296] sm:$0xff]
        %v310 = vld [vmem:[%s296 + $0x8] sm:$0xff]
        %v311 = vld [vmem:[%s296 + $0x10] sm:$0xff]
        %v312 = vld [vmem:[%s296 + $0x18] sm:$0xff]
        %v313 = vld [vmem:[%s301] sm:$0xff]
        %v314 = vld [vmem:[%s301 + $0x8] sm:$0xff]
        %v315 = vld [vmem:[%s301 + $0x10] sm:$0xff]
        %v316 = vld [vmem:[%s301 + $0x18] sm:$0xff]
        %v317 = vsub.f32 %v313, %v309
        %v318 = vsub.f32 %v314, %v310
        %v319 = vsub.f32 %v315, %v311
        %v320 = vsub.f32 %v316, %v312
        %v321 = vstv %s304
        %v322 = vmul.f32 %v317, %v321
        %v323 = vmul.f32 %v318, %v321
        %v324 = vmul.f32 %v319, %v321
        %v325 = vmul.f32 %v320, %v321
        %v326 = vadd.f32 %v309, %v322
        %v327 = vadd.f32 %v310, %v323
        %v328 = vadd.f32 %v311, %v324
        %v329 = vadd.f32 %v312, %v325
        %v330 = vld [vmem:[%s6] sm:$0xf]
        %vm331 = vcmask 261120
        %v333 = vsel %vm331, %v330, 0
        %335 = vmatprep.subr.mxu0 0.0
        %336 = vmatpush1.msra.mxu0 0.0
        %337 = vmatprep.subr.mxu0 0.0
        %338 = vmatpush1.msra.mxu0 0.0
        %339 = vmatprep.subr.mxu0 0.0
        %340 = vmatpush1.msra.mxu0 0.0
        %341 = vmatprep.subr.mxu0 0.0
        %342 = vmatpush1.msra.mxu0 0.0
        %343 = vmatprep.subr.mxu0 0.0
        %344 = vmatpush1.msra.mxu0 0.0
        %345 = vmatprep.subr.mxu0 0.0
        %346 = vmatpush1.msra.mxu0 0.0
        %347 = vmatprep.subr.mxu0 0.0
        %348 = vmatpush1.msra.mxu0 0.0
        %349 = vmatprep.subr.mxu0 0.0
        %350 = vmatpush1.msra.mxu0 0.0
        %351 = vmatprep.subr.mxu0 0.0
        %352 = vmatpush1.msra.mxu0 0.0
        %353 = vmatprep.subr.mxu0 0.0
        %354 = vmatpush1.msra.mxu0 0.0
        %355 = vmatprep.subr.mxu0 0.0
        %356 = vmatpush1.msra.mxu0 0.0
        %357 = vmatprep.subr.mxu0 0.0
        %358 = vmatpush1.msra.mxu0 0.0
        %359 = vmatprep.subr.mxu0 0.0
        %360 = vmatpush1.msra.mxu0 %v329
        %361 = vmatprep.subr.mxu0 0.0
        %362 = vmatpush1.msra.mxu0 %v328
        %363 = vmatprep.subr.mxu0 0.0
        %364 = vmatpush1.msra.mxu0 %v327
        %365 = vmatprep.subr.mxu0 0.0
        %366 = vmatpush1.msra.mxu0 %v326
        %367 = vmatprep.subr.mxu0 0.0
        %368 = vmatpush2.msra.mxu0 0.0
        %369 = vmatprep.subr.mxu0 0.0
        %370 = vmatpush2.msra.mxu0 0.0
        %371 = vmatprep.subr.mxu0 0.0
        %372 = vmatpush2.msra.mxu0 0.0
        %373 = vmatprep.subr.mxu0 0.0
        %374 = vmatpush2.msra.mxu0 0.0
        %375 = vmatprep.subr.mxu0 0.0
        %376 = vmatpush2.msra.mxu0 0.0
        %377 = vmatprep.subr.mxu0 0.0
        %378 = vmatpush2.msra.mxu0 0.0
        %379 = vmatprep.subr.mxu0 0.0
        %380 = vmatpush2.msra.mxu0 0.0
        %381 = vmatprep.subr.mxu0 0.0
        %382 = vmatpush2.msra.mxu0 0.0
        %383 = vmatprep.subr.mxu0 0.0
        %384 = vmatpush2.msra.mxu0 0.0
        %385 = vmatprep.subr.mxu0 0.0
        %386 = vmatpush2.msra.mxu0 0.0
        %387 = vmatprep.subr.mxu0 0.0
        %388 = vmatpush2.msra.mxu0 0.0
        %389 = vmatprep.subr.mxu0 0.0
        %390 = vmatpush2.msra.mxu0 0.0
        %391 = vmatprep.subr.mxu0 0.0
        %392 = vmatpush2.msra.mxu0 0.0
        %393 = vmatprep.subr.mxu0 0.0
        %394 = vmatpush2.msra.mxu0 0.0
        %395 = vmatprep.subr.mxu0 0.0
        %396 = vmatpush2.msra.mxu0 0.0
        %397 = vmatprep.subr.mxu0 0.0
        %398 = vmatpush2.msra.mxu0 0.0
        %399 = vmatprep.mubr.f32.mxu0 0.0
        %400 = vmatmul.mubr.f32.gmra.mxu0 %v333
        %v401 = vpop.f32.mrf.mxu0
        %v402 = vadd.f32 0.0, %v401
        %v403 = vpop.f32.mrf.mxu0
        %404 = vdwg.mxu0
        %vm405 = vcmask 60416
        %v406 = vsel %vm405, %v402, 0.0
        %407 = vadd.xlane.f32.xlu0 %v406
        %v408 = vpop.xlane.xlu0 %407
        %v409 = vrcp.pop 8.0
        %v410 = vmul.f32 %v408, %v409
        %v412 = vcombine.high %v305, %v305
        %vm413 = vcmask 31744
        %v415 = vsel %vm413, %v308, 0
        %vm417 = vcmask 1043456
        %v418 = vsel %vm417, %v305, 0
        %v420 = vsel %vm417, %v412, 0
        %422 = vmatprep.subr.mxu0 0.0
        %423 = vmatpush1.msra.mxu0 0.0
        %424 = vmatprep.subr.mxu0 0.0
        %425 = vmatpush1.msra.mxu0 0.0
        %426 = vmatprep.subr.mxu0 0.0
        %427 = vmatpush1.msra.mxu0 0.0
        %428 = vmatprep.subr.mxu0 0.0
        %429 = vmatpush1.msra.mxu0 0.0
        %430 = vmatprep.subr.mxu0 0.0
        %431 = vmatpush1.msra.mxu0 0.0
        %432 = vmatprep.subr.mxu0 0.0
        %433 = vmatpush1.msra.mxu0 0.0
        %434 = vmatprep.subr.mxu0 0.0
        %435 = vmatpush1.msra.mxu0 0.0
        %436 = vmatprep.subr.mxu0 0.0
        %437 = vmatpush1.msra.mxu0 0.0
        %438 = vmatprep.subr.mxu0 0.0
        %439 = vmatpush1.msra.mxu0 0.0
        %440 = vmatprep.subr.mxu0 0.0
        %441 = vmatpush1.msra.mxu0 0.0
        %442 = vmatprep.subr.mxu0 0.0
        %443 = vmatpush1.msra.mxu0 0.0
        %444 = vmatprep.subr.mxu0 0.0
        %445 = vmatpush1.msra.mxu0 0.0
        %446 = vmatprep.subr.mxu0 0.0
        %447 = vmatpush1.msra.mxu0 0.0
        %448 = vmatprep.subr.mxu0 0.0
        %449 = vmatpush1.msra.mxu0 0.0
        %450 = vmatprep.subr.mxu0 0.0
        %451 = vmatpush1.msra.mxu0 0.0
        %452 = vmatprep.subr.mxu0 %v420
        %453 = vmatpush1.msra.mxu0 %v418
        %454 = vmatprep.subr.mxu0 0.0
        %455 = vmatpush2.msra.mxu0 0.0
        %456 = vmatprep.subr.mxu0 0.0
        %457 = vmatpush2.msra.mxu0 0.0
        %458 = vmatprep.subr.mxu0 0.0
        %459 = vmatpush2.msra.mxu0 0.0
        %460 = vmatprep.subr.mxu0 0.0
        %461 = vmatpush2.msra.mxu0 0.0
        %462 = vmatprep.subr.mxu0 0.0
        %463 = vmatpush2.msra.mxu0 0.0
        %464 = vmatprep.subr.mxu0 0.0
        %465 = vmatpush2.msra.mxu0 0.0
        %466 = vmatprep.subr.mxu0 0.0
        %467 = vmatpush2.msra.mxu0 0.0
        %468 = vmatprep.subr.mxu0 0.0
        %469 = vmatpush2.msra.mxu0 0.0
        %470 = vmatprep.subr.mxu0 0.0
        %471 = vmatpush2.msra.mxu0 0.0
        %472 = vmatprep.subr.mxu0 0.0
        %473 = vmatpush2.msra.mxu0 0.0
        %474 = vmatprep.subr.mxu0 0.0
        %475 = vmatpush2.msra.mxu0 0.0
        %476 = vmatprep.subr.mxu0 0.0
        %477 = vmatpush2.msra.mxu0 0.0
        %478 = vmatprep.subr.mxu0 0.0
        %479 = vmatpush2.msra.mxu0 0.0
        %480 = vmatprep.subr.mxu0 0.0
        %481 = vmatpush2.msra.mxu0 0.0
        %482 = vmatprep.subr.mxu0 0.0
        %483 = vmatpush2.msra.mxu0 0.0
        %484 = vmatprep.subr.mxu0 0.0
        %485 = vmatpush2.msra.mxu0 0.0
        %486 = vmatprep.mubr.f32.mxu0 0.0
        %487 = vmatmul.mubr.f32.gmra.mxu0 %v415
        %v488 = vpop.f32.mrf.mxu0
        %v489 = vadd.f32 %v410, %v488
        %v490 = vpop.f32.mrf.mxu0
        %v491 = vadd.f32 %v410, %v490
        %492 = vdwg.mxu0
        %v495 = vcombine.low %v489, %v491
        %497 = vst [vmem:[%s281] sm:$0xff] %v495
        %s498 = sand.u32 %s172, 1
        %s499 = scalar_lea.sflag [#allocation6], %s498
        %s500 = sand.u32 %s172, 1
        %s501 = smul.addr %s500, 8
        %s502 = scalar_lea.vmem [#allocation5], %s501
        // Predicated region
        $region41: #{tpu_custom_call.1} parent=39 // pred_check
          %p503 = pneg %p182
        $region42: #{tpu_custom_call.1} parent=39 // pred_check_branch
          %505 = sbr.rel (%p503) target = $region44
        $region43: #{tpu_custom_call.1} parent=39 // pred_region
          %s506 = smul.u32 2, %s33
          %s508 = ssub.s32 128, 128
          %509 = vsyncadd %s499, %s508
          %s510 = smul.addr %s32, 2
          %s511 = sadd.s32 %s506, %s510
          %s512 = smul.addr %s511, 64
          %s513 = scalar_lea.hbm %s7, %s512
          %s515 = sshll.u32 %s502, 4
          %s516 = int_to_ptr.vmem [resolvable:$true] %s515
          %518 = dma.vmem_to_hbm [thread:$0]  %s516, 128, %s513, %s499
        $region44: #{tpu_custom_call.1} parent=39 // pred_fallthru
          _
      $region40: #{tpu_custom_call.1} parent=5 // pred_fallthru
        _
      %p519 = scmp.le.s32.totalorder 2, %s23
      // Predicated region
      $region45: #{tpu_custom_call.1} parent=5 // pred_check
        %p520 = pneg %p519
      $region46: #{tpu_custom_call.1} parent=5 // pred_check_branch
        %522 = sbr.rel (%p520) target = $region48
      $region47: #{tpu_custom_call.1} parent=5 // pred_region
        %s523 = ssub.s32 %s23, 2
        // Predicated region
        $region49: #{tpu_custom_call.1} parent=47 // pred_check
          %p524 = pneg %p188
        $region50: #{tpu_custom_call.1} parent=47 // pred_check_branch
          %526 = sbr.rel (%p524) target = $region52
        $region51: #{tpu_custom_call.1} parent=47 // pred_region
          %s527 = sand.u32 %s173, 1
          %s528 = scalar_lea.sflag [#allocation6], %s527
          %s529 = sand.u32 %s173, 1
          %s530 = smul.addr %s529, 8
          %s531 = scalar_lea.vmem [#allocation5], %s530
          %532 = dma.done %s528, 128
        $region52: #{tpu_custom_call.1} parent=47 // pred_fallthru
          _
      $region48: #{tpu_custom_call.1} parent=5 // pred_fallthru
        _
    $region6: #{tpu_custom_call.1} parent=1 // loop_footer
      %s27 = sadd.s32 1, %s23
    $region7: #{tpu_custom_call.1} parent=1 // loop_footer_branch
      %22 = sbr.rel target = $region3
    $region8: #{tpu_custom_call.1} parent=1 // loop_exit
      _
    %533 = vsyncpa [#allocation6], 1
    %s534 = scalar_lea.sflag [#allocation6], 1
    %535 = vsyncpa %s534, 1

</llo_original>
